<compile_context>
chip_gen: v7x
topology: tpu7x:2x2x1
jax: 0.10.0
libtpu: 0.0.40
codegen_flags: <defaults>
</compile_context>

<pallas_src>
import functools

import jax
import jax.numpy as jnp
from jax import lax
from jax.experimental import pallas as pl
from jax.experimental.pallas import tpu as pltpu

_EPS = 1e-5


# ------------------------------ helpers --------------------------------------

def _round_up(a, b):
    return (a + b - 1) // b * b


def _vmem_budget_bytes():
    """Per-generation scoped-VMEM budget (3/4 of physical, capped at 96 MiB)."""
    cap = 64 * 1024 * 1024                      # safe fallback (v7x physical)
    try:
        info = pltpu.get_tpu_info()
        cap = int(getattr(info, "vmem_capacity_bytes", cap))
    except Exception:
        pass
    return max(min(cap * 3 // 4, 96 * 1024 * 1024), 16 * 1024 * 1024)


def _choose_blocks(rows, hw, itemsize, budget_bytes):
    """Return (row_block, lane_block, padded_rows, padded_hw), tile aligned."""
    # ~1-4 MiB per input block; x-in + out are double-buffered (4 live blocks)
    # which stays well under the scoped-VMEM budget on every generation.
    max_block_bytes = max(min(budget_bytes // 8, 4 * 1024 * 1024), 32 * 1024)
    max_elems = max_block_bytes // itemsize

    hwp = _round_up(hw, 128)
    m = hwp // 128
    lane_cap = max(min(max_elems // (8 * 128), 16), 1)     # lane block <= 2048
    d = 1
    for cand in range(min(m, lane_cap), 0, -1):
        if m % cand == 0:                                   # bhw divides hwp
            d = cand
            break
    bhw = 128 * d

    rp = _round_up(rows, 8)
    br = (max_elems // bhw) // 8 * 8
    br = max(8, min(br, 512, rp))
    # Keep >= 2 blocks on a parallel grid axis when possible (v7x: 2 TCs).
    if rp // br < 2 and hwp // bhw < 2 and rp >= 16 and (rp // 2) % 8 == 0:
        br = rp // 2
    rp = _round_up(rp, br)
    return br, bhw, rp, hwp


# ----------------------------- Pallas kernels ---------------------------------

def _stats_kernel(x_ref, sum_ref, sq_ref, *, lane_groups):
    """Per-row lane-wise partial sums / sums-of-squares (VPU adds only).

    x_ref  : (br, bhw)  activation tile (native dtype)
    sum_ref: (br, 128)  f32 partial sums,     resident across the HW grid axis
    sq_ref : (br, 128)  f32 partial sum-sqs,  resident across the HW grid axis
    """
    @pl.when(pl.program_id(1) == 0)
    def _():
        sum_ref[...] = jnp.zeros_like(sum_ref)
        sq_ref[...] = jnp.zeros_like(sq_ref)

    x0 = x_ref[:, 0:128].astype(jnp.float32)
    s = x0
    q = x0 * x0
    for j in range(1, lane_groups):                 # static, lane-tile-aligned
        xj = x_ref[:, j * 128:(j + 1) * 128].astype(jnp.float32)
        s = s + xj
        q = q + xj * xj
    sum_ref[...] += s
    sq_ref[...] += q


def _apply_kernel(x_ref, scale_ref, shift_ref, o_ref):
    """out = scale[row] * x + shift[row] on a lane-dense (br, bhw) tile."""
    scale = scale_ref[...]                          # (br, 1) f32
    shift = shift_ref[...]                          # (br, 1) f32
    x = x_ref[...].astype(jnp.float32)
    o_ref[...] = (x * scale + shift).astype(o_ref.dtype)


# ------------------------------ JAX wrapper -----------------------------------

@jax.jit
def conditional_batch_norm(x_nchw, class_id, embed_w, embed_b):
    """ConditionalBatchNorm.forward.

    x_nchw  : (N, C, H, W)            any float dtype (kept for I/O)
    class_id: (N, n_condition)
    embed_w : (2C, n_condition)       PyTorch nn.Linear weight layout
    embed_b : (2C,)
    """
    N, C, H, W = x_nchw.shape
    HW = H * W
    rows = N * C

    budget = _vmem_budget_bytes()
    itemsize = jnp.dtype(x_nchw.dtype).itemsize
    br, bhw, rp, hwp = _choose_blocks(rows, HW, itemsize, budget)
    grid = (rp // br, hwp // bhw)

    x2d = x_nchw.reshape(rows, HW)
    if (rp, hwp) != (rows, HW):
        # zero padding is stats-neutral (contributes 0 to sum and sum-of-sq).
        x2d = jnp.pad(x2d, ((0, rp - rows), (0, hwp - HW)))

    # ---- pass 1: per-row lane-wise partial stats (reduction axis last) ------
    pstat_sum, pstat_sq = pl.pallas_call(
        functools.partial(_stats_kernel, lane_groups=bhw // 128),
        out_shape=(jax.ShapeDtypeStruct((rp, 128), jnp.float32),
                   jax.ShapeDtypeStruct((rp, 128), jnp.float32)),
        grid_spec=pltpu.PrefetchScalarGridSpec(
            num_scalar_prefetch=0,
            grid=grid,
            in_specs=[pl.BlockSpec((br, bhw), lambda ri, hi: (ri, hi))],
            out_specs=(pl.BlockSpec((br, 128), lambda ri, hi: (ri, 0)),
                       pl.BlockSpec((br, 128), lambda ri, hi: (ri, 0))),
        ),
        compiler_params=pltpu.CompilerParams(
            dimension_semantics=("parallel", "arbitrary"),
            vmem_limit_bytes=budget,
        ),
    )(x2d)

    # ---- tiny prep in plain XLA: fold stats + embed into per-row scale/shift
    row_sum = jnp.sum(pstat_sum[:rows], axis=1)                 # (rows,)
    row_sq = jnp.sum(pstat_sq[:rows], axis=1)
    ch_sum = row_sum.reshape(N, C).sum(axis=0)                  # (C,)
    ch_sq = row_sq.reshape(N, C).sum(axis=0)
    count = float(N * HW)
    mean = ch_sum / count
    # NOTE: E[x^2] - mean^2 in f32; clamp guards tiny negative round-off.
    # TODO(synk): use a two-pass / Welford variance if tighter agreement with
    #             PyTorch is needed for very large N*H*W or large-mean inputs.
    var = jnp.maximum(ch_sq / count - mean * mean, 0.0)
    inv = lax.rsqrt(var + _EPS)

    emb = (class_id.astype(jnp.float32)
           @ embed_w.astype(jnp.float32).T
           + embed_b.astype(jnp.float32))                       # (N, 2C)
    gamma, beta = emb[:, :C], emb[:, C:]
    scale = (gamma * inv[None, :]).reshape(rows, 1)
    shift = (beta - gamma * (mean * inv)[None, :]).reshape(rows, 1)
    if rp != rows:
        scale = jnp.pad(scale, ((0, rp - rows), (0, 0)))
        shift = jnp.pad(shift, ((0, rp - rows), (0, 0)))

    # ---- pass 2: memory-bound FMA over the full tensor, fully parallel ------
    out2d = pl.pallas_call(
        _apply_kernel,
        out_shape=jax.ShapeDtypeStruct((rp, hwp), x2d.dtype),
        grid_spec=pltpu.PrefetchScalarGridSpec(
            num_scalar_prefetch=0,
            grid=grid,
            in_specs=[pl.BlockSpec((br, bhw), lambda ri, hi: (ri, hi)),
                      pl.BlockSpec((br, 1), lambda ri, hi: (ri, 0)),
                      pl.BlockSpec((br, 1), lambda ri, hi: (ri, 0))],
            out_specs=pl.BlockSpec((br, bhw), lambda ri, hi: (ri, hi)),
        ),
        compiler_params=pltpu.CompilerParams(
            dimension_semantics=("parallel", "parallel"),
            vmem_limit_bytes=budget,
        ),
    )(x2d, scale, shift)

    return out2d[:rows, :HW].reshape(N, C, H, W)


# --------------------------------- demo ---------------------------------------

if __name__ == "__main__":
    key = jax.random.PRNGKey(0)
    k_x, k_c, k_b = jax.random.split(key, 3)

    N, C, H, W = 2, 4, 16, 16
    n_condition = 148

    x = jax.random.normal(k_x, (N, C, H, W), dtype=jnp.float32)
    class_id = jax.random.normal(k_c, (N, n_condition), dtype=jnp.float32)

    # nn.Linear(n_condition, 2*C) with the module's init:
    #   weight[:, :C] = 1, weight[:, C:] = 0 ; bias = default uniform init.
    embed_w = jnp.concatenate(
        [jnp.ones((2 * C, C), jnp.float32),
         jnp.zeros((2 * C, n_condition - C), jnp.float32)], axis=1)
    bound = 1.0 / (n_condition ** 0.5)
    embed_b = jax.random.uniform(k_b, (2 * C,), jnp.float32, -bound, bound)

    out = conditional_batch_norm(x, class_id, embed_w, embed_b)
    out = jax.block_until_ready(out)

    # pure-JAX reference (training-mode BN, biased variance, eps=1e-5)
    mean = jnp.mean(x, axis=(0, 2, 3), keepdims=True)
    var = jnp.mean((x - mean) ** 2, axis=(0, 2, 3), keepdims=True)
    xhat = (x - mean) / jnp.sqrt(var + _EPS)
    emb = class_id @ embed_w.T + embed_b
    gamma = emb[:, :C][:, :, None, None]
    beta = emb[:, C:][:, :, None, None]
    ref = gamma * xhat + beta

    assert out.shape == (N, C, H, W), out.shape
    assert jnp.all(jnp.isfinite(out))
    assert jnp.allclose(out, ref, atol=1e-3, rtol=1e-3), \
        float(jnp.max(jnp.abs(out - ref)))
    print("KERNEL_OK")
</pallas_src>

<mosaic_0001>
module attributes {stable_mosaic.version = 11 : i64} {
  func.func @_stats_kernel(%arg0: i32, %arg1: i32, %arg2: memref<8x256xf32, #tpu.memory_space<vmem>>, %arg3: memref<8x128xf32, #tpu.memory_space<vmem>>, %arg4: memref<8x128xf32, #tpu.memory_space<vmem>>) attributes {dimension_semantics = [#tpu.dimension_semantics<parallel>, #tpu.dimension_semantics<arbitrary>], iteration_bounds = array<i64: 1, 1>, scalar_prefetch = 0 : i64, scratch_operands = 0 : i64, tpu.core_type = #tpu.core_type<tc>, window_params = [{transform_indices = @transform_0, window_bounds = array<i64: 8, 256>}, {transform_indices = @transform_1, window_bounds = array<i64: 8, 128>}, {transform_indices = @transform_2, window_bounds = array<i64: 8, 128>}]} {
    %c0_i32 = arith.constant 0 : i32
    %0 = arith.cmpi eq, %arg1, %c0_i32 : i32
    %1 = arith.extui %0 : i1 to i32
    %c0_i32_0 = arith.constant 0 : i32
    %2 = arith.cmpi ne, %1, %c0_i32_0 : i32
    scf.if %2 {
      %cst = arith.constant 0.000000e+00 : f32
      %15 = vector.broadcast %cst : f32 to vector<8x128xf32>
      %c0_11 = arith.constant 0 : index
      %c0_12 = arith.constant 0 : index
      %16 = vector.load %arg3[%c0_11, %c0_12] : memref<8x128xf32, #tpu.memory_space<vmem>>, vector<8x128xf32>
      tpu.vector_store %arg3[%c0_11, %c0_12], %15 {strides = array<i32>} : memref<8x128xf32, #tpu.memory_space<vmem>>, vector<8x128xf32>,
      %cst_13 = arith.constant 0.000000e+00 : f32
      %17 = vector.broadcast %cst_13 : f32 to vector<8x128xf32>
      %c0_14 = arith.constant 0 : index
      %c0_15 = arith.constant 0 : index
      %18 = vector.load %arg4[%c0_14, %c0_15] : memref<8x128xf32, #tpu.memory_space<vmem>>, vector<8x128xf32>
      tpu.vector_store %arg4[%c0_14, %c0_15], %17 {strides = array<i32>} : memref<8x128xf32, #tpu.memory_space<vmem>>, vector<8x128xf32>,
    } else {
    }
    %c0 = arith.constant 0 : index
    %c0_1 = arith.constant 0 : index
    %3 = vector.load %arg2[%c0, %c0_1] : memref<8x256xf32, #tpu.memory_space<vmem>>, vector<8x128xf32>
    %4 = arith.mulf %3, %3 : vector<8x128xf32>
    %c0_2 = arith.constant 0 : index
    %c128 = arith.constant 128 : index
    %5 = vector.load %arg2[%c0_2, %c128] : memref<8x256xf32, #tpu.memory_space<vmem>>, vector<8x128xf32>
    %6 = arith.addf %3, %5 : vector<8x128xf32>
    %7 = arith.mulf %5, %5 : vector<8x128xf32>
    %8 = arith.addf %4, %7 : vector<8x128xf32>
    %c0_3 = arith.constant 0 : index
    %c0_4 = arith.constant 0 : index
    %9 = vector.load %arg3[%c0_3, %c0_4] : memref<8x128xf32, #tpu.memory_space<vmem>>, vector<8x128xf32>
    %10 = arith.addf %9, %6 : vector<8x128xf32>
    %c0_5 = arith.constant 0 : index
    %c0_6 = arith.constant 0 : index
    %11 = vector.load %arg3[%c0_5, %c0_6] : memref<8x128xf32, #tpu.memory_space<vmem>>, vector<8x128xf32>
    tpu.vector_store %arg3[%c0_5, %c0_6], %10 {strides = array<i32>} : memref<8x128xf32, #tpu.memory_space<vmem>>, vector<8x128xf32>,
    %c0_7 = arith.constant 0 : index
    %c0_8 = arith.constant 0 : index
    %12 = vector.load %arg4[%c0_7, %c0_8] : memref<8x128xf32, #tpu.memory_space<vmem>>, vector<8x128xf32>
    %13 = arith.addf %12, %8 : vector<8x128xf32>
    %c0_9 = arith.constant 0 : index
    %c0_10 = arith.constant 0 : index
    %14 = vector.load %arg4[%c0_9, %c0_10] : memref<8x128xf32, #tpu.memory_space<vmem>>, vector<8x128xf32>
    tpu.vector_store %arg4[%c0_9, %c0_10], %13 {strides = array<i32>} : memref<8x128xf32, #tpu.memory_space<vmem>>, vector<8x128xf32>,
    return
  }
  func.func @transform_0(%arg0: i32, %arg1: i32) -> (i32, i32) {
    %c0_i32 = arith.constant 0 : i32
    return %arg0, %arg1 : i32, i32
  }
  func.func @transform_1(%arg0: i32, %arg1: i32) -> (i32, i32) {
    %c0_i32 = arith.constant 0 : i32
    %c0_i32_0 = arith.constant 0 : i32
    return %arg0, %c0_i32 : i32, i32
  }
  func.func @transform_2(%arg0: i32, %arg1: i32) -> (i32, i32) {
    %c0_i32 = arith.constant 0 : i32
    %c0_i32_0 = arith.constant 0 : i32
    return %arg0, %c0_i32 : i32, i32
  }
}

module attributes {stable_mosaic.version = 11 : i64} {
  func.func @_apply_kernel(%arg0: i32, %arg1: i32, %arg2: memref<8x256xf32, #tpu.memory_space<vmem>>, %arg3: memref<8x1xf32, #tpu.memory_space<vmem>>, %arg4: memref<8x1xf32, #tpu.memory_space<vmem>>, %arg5: memref<8x256xf32, #tpu.memory_space<vmem>>) attributes {dimension_semantics = [#tpu.dimension_semantics<parallel>, #tpu.dimension_semantics<parallel>], iteration_bounds = array<i64: 1, 1>, scalar_prefetch = 0 : i64, scratch_operands = 0 : i64, tpu.core_type = #tpu.core_type<tc>, window_params = [{transform_indices = @transform_0, window_bounds = array<i64: 8, 256>}, {transform_indices = @transform_1, window_bounds = array<i64: 8, 1>}, {transform_indices = @transform_2, window_bounds = array<i64: 8, 1>}, {transform_indices = @transform_3, window_bounds = array<i64: 8, 256>}]} {
    %c0 = arith.constant 0 : index
    %c0_0 = arith.constant 0 : index
    %0 = vector.load %arg3[%c0, %c0_0] : memref<8x1xf32, #tpu.memory_space<vmem>>, vector<8x1xf32>
    %c0_1 = arith.constant 0 : index
    %c0_2 = arith.constant 0 : index
    %1 = vector.load %arg4[%c0_1, %c0_2] : memref<8x1xf32, #tpu.memory_space<vmem>>, vector<8x1xf32>
    %c0_3 = arith.constant 0 : index
    %c0_4 = arith.constant 0 : index
    %2 = vector.load %arg2[%c0_3, %c0_4] : memref<8x256xf32, #tpu.memory_space<vmem>>, vector<8x256xf32>
    %3 = vector.broadcast %0 : vector<8x1xf32> to vector<8x256xf32>
    %4 = arith.mulf %2, %3 : vector<8x256xf32>
    %5 = vector.broadcast %1 : vector<8x1xf32> to vector<8x256xf32>
    %6 = arith.addf %4, %5 : vector<8x256xf32>
    %c0_5 = arith.constant 0 : index
    %c0_6 = arith.constant 0 : index
    %7 = vector.load %arg5[%c0_5, %c0_6] : memref<8x256xf32, #tpu.memory_space<vmem>>, vector<8x256xf32>
    tpu.vector_store %arg5[%c0_5, %c0_6], %6 {strides = array<i32>} : memref<8x256xf32, #tpu.memory_space<vmem>>, vector<8x256xf32>,
    return
  }
  func.func @transform_0(%arg0: i32, %arg1: i32) -> (i32, i32) {
    %c0_i32 = arith.constant 0 : i32
    return %arg0, %arg1 : i32, i32
  }
  func.func @transform_1(%arg0: i32, %arg1: i32) -> (i32, i32) {
    %c0_i32 = arith.constant 0 : i32
    %c0_i32_0 = arith.constant 0 : i32
    return %arg0, %c0_i32 : i32, i32
  }
  func.func @transform_2(%arg0: i32, %arg1: i32) -> (i32, i32) {
    %c0_i32 = arith.constant 0 : i32
    %c0_i32_0 = arith.constant 0 : i32
    return %arg0, %c0_i32 : i32, i32
  }
  func.func @transform_3(%arg0: i32, %arg1: i32) -> (i32, i32) {
    %c0_i32 = arith.constant 0 : i32
    return %arg0, %arg1 : i32, i32
  }
}

</mosaic_0001>

<llo_original>
// kernel: conditional_batch_norm.3
$region0: #{conditional_batch_norm.3}
  #allocation0 [shape = 'u32[]', space=smem, size = 0x4, offset = 0x4, fixed_abs, tag = 'smem constant byte address 0x4 - core index']
  #allocation1 [shape = 'u32[144,128]{1,0:T(1,128)}', space=vmem, size = 0x12000, scoped, tag = 'internal scratch']
  %s0 = inlined_call_operand.vmem [shape: f32[8,256], index: 0, kind: input, shape index: {}]
  %s1 = inlined_call_operand.vmem [shape: f32[8,1], index: 1, kind: input, shape index: {}]
  %s2 = inlined_call_operand.vmem [shape: f32[8,1], index: 2, kind: input, shape index: {}]
  %s3 = inlined_call_operand.vmem [shape: f32[8,256], index: 3, kind: output, shape index: {}]
  %s4 = sld [smem:[#allocation0]]
  $region22: #{conditional_batch_norm.3} parent=0
    _
  %s6 = ssub.s32 1, %s4
  %s7 = scalar_select 0, %s6, %s4
  // Predicated region
  $region2: #{conditional_batch_norm.3} parent=0 // pred_check
    _
  $region3: #{conditional_batch_norm.3} parent=0 // pred_check_branch
    %9 = sbr.rel (0) target = $region5
  $region4: #{conditional_batch_norm.3} parent=0 // pred_region
    _
  $region5: #{conditional_batch_norm.3} parent=0 // pred_fallthru
    _
  // Predicated region
  $region6: #{conditional_batch_norm.3} parent=0 // pred_check
    _
  $region7: #{conditional_batch_norm.3} parent=0 // pred_check_branch
    %11 = sbr.rel (0) target = $region9
  $region8: #{conditional_batch_norm.3} parent=0 // pred_region
    _
  $region9: #{conditional_batch_norm.3} parent=0 // pred_fallthru
    _
  // Predicated region
  $region10: #{conditional_batch_norm.3} parent=0 // pred_check
    _
  $region11: #{conditional_batch_norm.3} parent=0 // pred_check_branch
    %13 = sbr.rel (0) target = $region13
  $region12: #{conditional_batch_norm.3} parent=0 // pred_region
    _
  $region13: #{conditional_batch_norm.3} parent=0 // pred_fallthru
    _
  %v14 = vld [vmem:[%s1] sm:$0xff]
  %v15 = vld [vmem:[%s2] sm:$0xff]
  %v16 = vld [vmem:[%s0] sm:$0xff]
  %v17 = vld [vmem:[%s0 + $0x8] sm:$0xff]
  %19 = vset.pattern.permute.xlu0 0
  %20 = vperm.xlu0 %19, %v14
  %v21 = vpop.permute.xlu0 %20
  %v23 = vmul.f32 %v16, %v21
  %v24 = vmul.f32 %v17, %v21
  %26 = vset.pattern.permute.xlu0 0
  %27 = vperm.xlu0 %26, %v15
  %v28 = vpop.permute.xlu0 %27
  %v30 = vadd.f32 %v23, %v28
  %v31 = vadd.f32 %v24, %v28
  %32 = vst [vmem:[%s3] sm:$0xff] %v30
  %33 = vst [vmem:[%s3 + $0x8] sm:$0xff] %v31
  // Predicated region
  $region14: #{conditional_batch_norm.3} parent=0 // pred_check
    _
  $region15: #{conditional_batch_norm.3} parent=0 // pred_check_branch
    %35 = sbr.rel (0) target = $region17
  $region16: #{conditional_batch_norm.3} parent=0 // pred_region
    _
  $region17: #{conditional_batch_norm.3} parent=0 // pred_fallthru
    _
  // Predicated region
  $region18: #{conditional_batch_norm.3} parent=0 // pred_check
    _
  $region19: #{conditional_batch_norm.3} parent=0 // pred_check_branch
    %37 = sbr.rel (0) target = $region21
  $region20: #{conditional_batch_norm.3} parent=0 // pred_region
    _
  $region21: #{conditional_batch_norm.3} parent=0 // pred_fallthru
    _

// kernel: conditional_batch_norm.2
$region0: #{conditional_batch_norm.2}
  #allocation0 [shape = 'u32[]', space=smem, size = 0x4, offset = 0x4, fixed_abs, tag = 'smem constant byte address 0x4 - core index']
  #allocation1 [shape = 'u32[144,128]{1,0:T(1,128)}', space=vmem, size = 0x12000, scoped, tag = 'internal scratch']
  %s0 = inlined_call_operand.vmem [shape: f32[8,256], index: 0, kind: input, shape index: {}]
  %s1 = inlined_call_operand.vmem [shape: f32[8,128], index: 1, kind: output, shape index: {0}]
  %s2 = inlined_call_operand.vmem [shape: f32[8,128], index: 2, kind: output, shape index: {1}]
  %3 = xla_tuple %s1, %s2
  %s4 = sld [smem:[#allocation0]]
  $region26: #{conditional_batch_norm.2} parent=0
    _
  %s6 = ssub.s32 1, %s4
  %s7 = scalar_select 0, %s6, %s4
  // Predicated region
  $region2: #{conditional_batch_norm.2} parent=0 // pred_check
    _
  $region3: #{conditional_batch_norm.2} parent=0 // pred_check_branch
    %9 = sbr.rel (0) target = $region5
  $region4: #{conditional_batch_norm.2} parent=0 // pred_region
    _
  $region5: #{conditional_batch_norm.2} parent=0 // pred_fallthru
    _
  %p10 = scmp.eq.s32.totalorder 0, 0
  // Predicated region
  $region6: #{conditional_batch_norm.2} parent=0 // pred_check
    %p11 = pneg %p10
  $region7: #{conditional_batch_norm.2} parent=0 // pred_check_branch
    %13 = sbr.rel (%p11) target = $region9
  $region8: #{conditional_batch_norm.2} parent=0 // pred_region
    %14 = vst [vmem:[%s1] sm:$0xff] 0.0
    %15 = vst [vmem:[%s2] sm:$0xff] 0.0
  $region9: #{conditional_batch_norm.2} parent=0 // pred_fallthru
    _
  %v16 = vld [vmem:[%s0] sm:$0xff]
  %v17 = vmul.f32 %v16, %v16
  %v18 = vld [vmem:[%s0 + $0x8] sm:$0xff]
  %v19 = vadd.f32 %v16, %v18
  %v20 = vmul.f32 %v18, %v18
  %v21 = vadd.f32 %v17, %v20
  %v22 = vld [vmem:[%s1] sm:$0xff]
  %v23 = vadd.f32 %v22, %v19
  %24 = vst [vmem:[%s1] sm:$0xff] %v23
  %v25 = vld [vmem:[%s2] sm:$0xff]
  %v26 = vadd.f32 %v25, %v21
  %27 = vst [vmem:[%s2] sm:$0xff] %v26
  // Predicated region
  $region10: #{conditional_batch_norm.2} parent=0 // pred_check
    _
  $region11: #{conditional_batch_norm.2} parent=0 // pred_check_branch
    %29 = sbr.rel (0) target = $region13
  $region12: #{conditional_batch_norm.2} parent=0 // pred_region
    _
  $region13: #{conditional_batch_norm.2} parent=0 // pred_fallthru
    _
  // Predicated region
  $region14: #{conditional_batch_norm.2} parent=0 // pred_check
    _
  $region15: #{conditional_batch_norm.2} parent=0 // pred_check_branch
    %31 = sbr.rel (0) target = $region17
  $region16: #{conditional_batch_norm.2} parent=0 // pred_region
    _
  $region17: #{conditional_batch_norm.2} parent=0 // pred_fallthru
    _
  // Predicated region
  $region18: #{conditional_batch_norm.2} parent=0 // pred_check
    _
  $region19: #{conditional_batch_norm.2} parent=0 // pred_check_branch
    %33 = sbr.rel (0) target = $region21
  $region20: #{conditional_batch_norm.2} parent=0 // pred_region
    _
  $region21: #{conditional_batch_norm.2} parent=0 // pred_fallthru
    _
  // Predicated region
  $region22: #{conditional_batch_norm.2} parent=0 // pred_check
    _
  $region23: #{conditional_batch_norm.2} parent=0 // pred_check_branch
    %35 = sbr.rel (0) target = $region25
  $region24: #{conditional_batch_norm.2} parent=0 // pred_region
    _
  $region25: #{conditional_batch_norm.2} parent=0 // pred_fallthru
    _

</llo_original>
